<compile_context>
chip_gen: v6e
topology: v6e:2x2x1
jax: 0.10.0
libtpu: 0.0.40
codegen_flags: <defaults>
</compile_context>

<pallas_src>
import math

import jax
import jax.numpy as jnp
from jax.experimental import pallas as pl
from jax.experimental.pallas import tpu as pltpu


def _round_up(x: int, m: int) -> int:
    return ((x + m - 1) // m) * m


def _cap_tb_for_vmem(tb: int, n_in: int, n_actions: int,
                     budget_bytes: int = 24 << 20) -> int:
    """Cap the batch tile so double-buffered I/O + f32/bf16 intermediates stay well
    under the default 32 MiB scoped VMEM limit (and v7x's 64 MiB physical VMEM)."""
    per_row = 2 * (n_in * 4 + n_actions * 4)                  # pipelined x/out buffers
    per_row += 4 * (128 + 64 + n_actions)                     # f32 h1/h2/logits/e
    per_row += 2 * (128 + 64 + n_in)                          # bf16 casts of x/h1/h2
    max_rows = max(8, budget_bytes // per_row)
    return max(8, min(tb, (max_rows // 8) * 8))


def policy_kernel(x_ref, w1_ref, b1_ref, w2_ref, b2_ref, w3_ref, b3_ref, out_ref):
    # Activations cast to bf16 for the MXU; accumulate in f32.
    x = x_ref[...].astype(jnp.bfloat16)                               # (TB, n_in)

    # Layer 1: Linear(n_in, 128) + ReLU
    h1 = jnp.dot(x, w1_ref[...], preferred_element_type=jnp.float32) + b1_ref[...]
    h1 = jnp.maximum(h1, 0.0).astype(jnp.bfloat16)

    # Layer 2: Linear(128, 64) + ReLU
    h2 = jnp.dot(h1, w2_ref[...], preferred_element_type=jnp.float32) + b2_ref[...]
    h2 = jnp.maximum(h2, 0.0).astype(jnp.bfloat16)

    # Layer 3: Linear(64, n_actions)
    logits = jnp.dot(h2, w3_ref[...], preferred_element_type=jnp.float32) + b3_ref[...]

    # Softmax(dim=-1), numerically stable, f32 epilogue.
    # Exact divide (denominator is (TB,1) -> nearly free) so rows sum to 1 exactly,
    # which downstream Categorical sampling / log-prob code relies on.
    m = jnp.max(logits, axis=-1, keepdims=True)
    e = jnp.exp(logits - m)
    denom = jnp.sum(e, axis=-1, keepdims=True)
    out_ref[...] = (e / denom).astype(out_ref.dtype)


def policy_forward(x, params, *, tb=None, out_dtype=jnp.float32):
    """x: (B, n_inputs) f32 (or bf16). params: (w1,b1,w2,b2,w3,b3) with w_i as (in, out)."""
    w1, b1, w2, b2, w3, b3 = params
    B, n_in = x.shape
    n_actions = w3.shape[1]

    # ---- Batch-tile selection ----------------------------------------------------
    # Big default tile: per-grid-step overhead (~0.35 us) dominates this tiny-compute
    # kernel, and larger DMAs get closer to the HBM roofline.
    if tb is None:
        tb = 2048
    tb = _round_up(max(8, min(tb, _round_up(B, 8))), 8)
    tb = _cap_tb_for_vmem(tb, n_in, n_actions)
    # Never collapse to grid=(1,): keep >= 2 grid steps whenever the batch allows so
    # DMA/compute pipelining and v7x dual-TC batch sharding stay active.
    if tb >= B and B > 8:
        tb = _round_up(pl.cdiv(B, 2), 8)

    # Zero-pad the batch to a multiple of tb (ragged tail handled in the wrapper;
    # padded rows are zeros -> softmax is well-defined, no inf/NaN).
    Bp = _round_up(B, tb)
    if Bp != B:
        x = jnp.pad(x, ((0, Bp - B), (0, 0)))
    grid = (Bp // tb,)

    # Cast weights to bf16 once (halves weight DMA bytes; biases stay f32).
    w1b = w1.astype(jnp.bfloat16)
    w2b = w2.astype(jnp.bfloat16)
    w3b = w3.astype(jnp.bfloat16)

    # Weights/biases: constant index_map -> stay VMEM-resident across grid steps.
    # TODO(synk): if a Mosaic dump shows these small blocks being re-DMA'd per step,
    # pin them with pipeline_mode=pl.Buffered(1) or a pl.when(program_id==0) copy.
    resident = lambda a: pl.BlockSpec(a.shape, lambda i: (0,) * a.ndim)

    out = pl.pallas_call(
        policy_kernel,
        out_shape=jax.ShapeDtypeStruct((Bp, n_actions), out_dtype),
        grid=grid,
        in_specs=[
            pl.BlockSpec((tb, n_in), lambda i: (i, 0)),   # streamed activation tile
            resident(w1b), resident(b1),
            resident(w2b), resident(b2),
            resident(w3b), resident(b3),
        ],
        out_specs=pl.BlockSpec((tb, n_actions), lambda i: (i, 0)),
        compiler_params=pltpu.CompilerParams(
            dimension_semantics=("parallel",),            # shard batch tiles across TCs (v7x)
        ),
    )(x, w1b, b1, w2b, b2, w3b, b3)

    return out[:B] if Bp != B else out


def init_params(key, n_inputs, n_actions):
    """Deterministic init matching nn.Linear's uniform(-1/sqrt(fan_in), 1/sqrt(fan_in))."""
    dims = [(n_inputs, 128), (128, 64), (64, n_actions)]
    params = []
    for (fan_in, fan_out) in dims:
        key, kw, kb = jax.random.split(key, 3)
        bound = 1.0 / math.sqrt(fan_in)
        w = jax.random.uniform(kw, (fan_in, fan_out), jnp.float32, -bound, bound)
        b = jax.random.uniform(kb, (1, fan_out), jnp.float32, -bound, bound)
        params += [w, b]
    return tuple(params)


def reference_forward(x, params):
    """Pure-JAX reference mirroring the kernel's bf16-matmul / f32-epilogue recipe."""
    w1, b1, w2, b2, w3, b3 = params
    bf = jnp.bfloat16
    h1 = jnp.maximum(
        jnp.dot(x.astype(bf), w1.astype(bf), preferred_element_type=jnp.float32) + b1, 0.0)
    h2 = jnp.maximum(
        jnp.dot(h1.astype(bf), w2.astype(bf), preferred_element_type=jnp.float32) + b2, 0.0)
    logits = jnp.dot(h2.astype(bf), w3.astype(bf), preferred_element_type=jnp.float32) + b3
    return jax.nn.softmax(logits, axis=-1)


if __name__ == "__main__":
    n_inputs, n_actions = 32, 8
    key = jax.random.PRNGKey(0)
    key, kx1, kx2 = jax.random.split(key, 3)
    params = init_params(key, n_inputs, n_actions)

    # Case 1: B divisible by the chosen tile -> exercises the >=2-step grid heuristic
    # (default tb path picks tb=8, grid=(2,)).
    B1 = 16
    x1 = jax.random.normal(kx1, (B1, n_inputs), jnp.float32)
    probs1 = jax.block_until_ready(policy_forward(x1, params))
    ref1 = reference_forward(x1, params)
    assert probs1.shape == (B1, n_actions)
    assert jnp.allclose(jnp.sum(probs1, axis=-1), 1.0, atol=1e-4)
    assert jnp.allclose(probs1, ref1, atol=2e-3, rtol=2e-3)

    # Case 2: ragged batch -> exercises the wrapper-side zero-pad + slice path.
    B2 = 20
    x2 = jax.random.normal(kx2, (B2, n_inputs), jnp.float32)
    probs2 = jax.block_until_ready(policy_forward(x2, params))
    ref2 = reference_forward(x2, params)
    assert probs2.shape == (B2, n_actions)
    assert jnp.allclose(jnp.sum(probs2, axis=-1), 1.0, atol=1e-4)
    assert jnp.allclose(probs2, ref2, atol=2e-3, rtol=2e-3)

    print("KERNEL_OK")
</pallas_src>

<mosaic_0001>
module attributes {stable_mosaic.version = 11 : i64} {
  func.func @policy_kernel(%arg0: i32, %arg1: memref<8x32xf32, #tpu.memory_space<vmem>>, %arg2: memref<32x128xbf16, #tpu.memory_space<vmem>>, %arg3: memref<1x128xf32, #tpu.memory_space<vmem>>, %arg4: memref<128x64xbf16, #tpu.memory_space<vmem>>, %arg5: memref<1x64xf32, #tpu.memory_space<vmem>>, %arg6: memref<64x8xbf16, #tpu.memory_space<vmem>>, %arg7: memref<1x8xf32, #tpu.memory_space<vmem>>, %arg8: memref<8x8xf32, #tpu.memory_space<vmem>>) attributes {dimension_semantics = [#tpu.dimension_semantics<parallel>], iteration_bounds = array<i64: 2>, scalar_prefetch = 0 : i64, scratch_operands = 0 : i64, tpu.core_type = #tpu.core_type<tc>, window_params = [{transform_indices = @transform_0, window_bounds = array<i64: 8, 32>}, {pipeline_mode = #tpu.pipeline_mode<synchronous>, transform_indices = @transform_1, window_bounds = array<i64: 32, 128>}, {pipeline_mode = #tpu.pipeline_mode<synchronous>, transform_indices = @transform_2, window_bounds = array<i64: 1, 128>}, {pipeline_mode = #tpu.pipeline_mode<synchronous>, transform_indices = @transform_3, window_bounds = array<i64: 128, 64>}, {pipeline_mode = #tpu.pipeline_mode<synchronous>, transform_indices = @transform_4, window_bounds = array<i64: 1, 64>}, {pipeline_mode = #tpu.pipeline_mode<synchronous>, transform_indices = @transform_5, window_bounds = array<i64: 64, 8>}, {pipeline_mode = #tpu.pipeline_mode<synchronous>, transform_indices = @transform_6, window_bounds = array<i64: 1, 8>}, {transform_indices = @transform_7, window_bounds = array<i64: 8, 8>}]} {
    %c0 = arith.constant 0 : index
    %c0_0 = arith.constant 0 : index
    %0 = vector.load %arg1[%c0, %c0_0] : memref<8x32xf32, #tpu.memory_space<vmem>>, vector<8x32xf32>
    %1 = arith.truncf %0 : vector<8x32xf32> to vector<8x32xbf16>
    %c0_1 = arith.constant 0 : index
    %c0_2 = arith.constant 0 : index
    %2 = vector.load %arg2[%c0_1, %c0_2] : memref<32x128xbf16, #tpu.memory_space<vmem>>, vector<32x128xbf16>
    %cst = arith.constant dense<0.000000e+00> : vector<8x128xf32>
    %3 = tpu.matmul %1, %2, %cst {dimension_numbers = #tpu.dot_dimension_numbers<[1], [0], [0], [1], [0, 0, 1, 1], [], []>} : vector<8x32xbf16>, vector<32x128xbf16>, vector<8x128xf32> -> vector<8x128xf32>
    %c0_3 = arith.constant 0 : index
    %c0_4 = arith.constant 0 : index
    %4 = vector.load %arg3[%c0_3, %c0_4] : memref<1x128xf32, #tpu.memory_space<vmem>>, vector<1x128xf32>
    %5 = vector.broadcast %4 : vector<1x128xf32> to vector<8x128xf32>
    %6 = arith.addf %3, %5 : vector<8x128xf32>
    %cst_5 = arith.constant 0.000000e+00 : f32
    %7 = vector.broadcast %cst_5 : f32 to vector<8x128xf32>
    %8 = arith.maximumf %6, %7 : vector<8x128xf32>
    %9 = arith.truncf %8 : vector<8x128xf32> to vector<8x128xbf16>
    %c0_6 = arith.constant 0 : index
    %c0_7 = arith.constant 0 : index
    %10 = vector.load %arg4[%c0_6, %c0_7] : memref<128x64xbf16, #tpu.memory_space<vmem>>, vector<128x64xbf16>
    %cst_8 = arith.constant dense<0.000000e+00> : vector<8x64xf32>
    %11 = tpu.matmul %9, %10, %cst_8 {dimension_numbers = #tpu.dot_dimension_numbers<[1], [0], [0], [1], [0, 0, 1, 1], [], []>} : vector<8x128xbf16>, vector<128x64xbf16>, vector<8x64xf32> -> vector<8x64xf32>
    %c0_9 = arith.constant 0 : index
    %c0_10 = arith.constant 0 : index
    %12 = vector.load %arg5[%c0_9, %c0_10] : memref<1x64xf32, #tpu.memory_space<vmem>>, vector<1x64xf32>
    %13 = vector.broadcast %12 : vector<1x64xf32> to vector<8x64xf32>
    %14 = arith.addf %11, %13 : vector<8x64xf32>
    %cst_11 = arith.constant 0.000000e+00 : f32
    %15 = vector.broadcast %cst_11 : f32 to vector<8x64xf32>
    %16 = arith.maximumf %14, %15 : vector<8x64xf32>
    %17 = arith.truncf %16 : vector<8x64xf32> to vector<8x64xbf16>
    %c0_12 = arith.constant 0 : index
    %c0_13 = arith.constant 0 : index
    %18 = vector.load %arg6[%c0_12, %c0_13] : memref<64x8xbf16, #tpu.memory_space<vmem>>, vector<64x8xbf16>
    %cst_14 = arith.constant dense<0.000000e+00> : vector<8x8xf32>
    %19 = tpu.matmul %17, %18, %cst_14 {dimension_numbers = #tpu.dot_dimension_numbers<[1], [0], [0], [1], [0, 0, 1, 1], [], []>} : vector<8x64xbf16>, vector<64x8xbf16>, vector<8x8xf32> -> vector<8x8xf32>
    %c0_15 = arith.constant 0 : index
    %c0_16 = arith.constant 0 : index
    %20 = vector.load %arg7[%c0_15, %c0_16] : memref<1x8xf32, #tpu.memory_space<vmem>>, vector<1x8xf32>
    %21 = vector.broadcast %20 : vector<1x8xf32> to vector<8x8xf32>
    %22 = arith.addf %19, %21 : vector<8x8xf32>
    %cst_17 = arith.constant dense<0xFF800000> : vector<8xf32>
    %23 = vector.multi_reduction <maximumf>, %22, %cst_17 [1] : vector<8x8xf32> to vector<8xf32>
    %24 = vector.shape_cast %23 : vector<8xf32> to vector<8x1xf32>
    %25 = vector.broadcast %24 : vector<8x1xf32> to vector<8x8xf32>
    %26 = arith.subf %22, %25 : vector<8x8xf32>
    %27 = math.exp %26 : vector<8x8xf32>
    %cst_18 = arith.constant dense<0.000000e+00> : vector<8xf32>
    %28 = vector.multi_reduction <add>, %27, %cst_18 [1] : vector<8x8xf32> to vector<8xf32>
    %29 = vector.shape_cast %28 : vector<8xf32> to vector<8x1xf32>
    %30 = vector.broadcast %29 : vector<8x1xf32> to vector<8x8xf32>
    %31 = arith.divf %27, %30 : vector<8x8xf32>
    %c0_19 = arith.constant 0 : index
    %c0_20 = arith.constant 0 : index
    %32 = vector.load %arg8[%c0_19, %c0_20] : memref<8x8xf32, #tpu.memory_space<vmem>>, vector<8x8xf32>
    tpu.vector_store %arg8[%c0_19, %c0_20], %31 {strides = array<i32>} : memref<8x8xf32, #tpu.memory_space<vmem>>, vector<8x8xf32>,
    return
  }
  func.func @transform_0(%arg0: i32) -> (i32, i32) {
    %c0_i32 = arith.constant 0 : i32
    %c0_i32_0 = arith.constant 0 : i32
    return %arg0, %c0_i32 : i32, i32
  }
  func.func @transform_1(%arg0: i32) -> (i32, i32) {
    %c0_i32 = arith.constant 0 : i32
    %c0_i32_0 = arith.constant 0 : i32
    %c0_i32_1 = arith.constant 0 : i32
    return %c0_i32, %c0_i32_0 : i32, i32
  }
  func.func @transform_2(%arg0: i32) -> (i32, i32) {
    %c0_i32 = arith.constant 0 : i32
    %c0_i32_0 = arith.constant 0 : i32
    %c0_i32_1 = arith.constant 0 : i32
    return %c0_i32, %c0_i32_0 : i32, i32
  }
  func.func @transform_3(%arg0: i32) -> (i32, i32) {
    %c0_i32 = arith.constant 0 : i32
    %c0_i32_0 = arith.constant 0 : i32
    %c0_i32_1 = arith.constant 0 : i32
    return %c0_i32, %c0_i32_0 : i32, i32
  }
  func.func @transform_4(%arg0: i32) -> (i32, i32) {
    %c0_i32 = arith.constant 0 : i32
    %c0_i32_0 = arith.constant 0 : i32
    %c0_i32_1 = arith.constant 0 : i32
    return %c0_i32, %c0_i32_0 : i32, i32
  }
  func.func @transform_5(%arg0: i32) -> (i32, i32) {
    %c0_i32 = arith.constant 0 : i32
    %c0_i32_0 = arith.constant 0 : i32
    %c0_i32_1 = arith.constant 0 : i32
    return %c0_i32, %c0_i32_0 : i32, i32
  }
  func.func @transform_6(%arg0: i32) -> (i32, i32) {
    %c0_i32 = arith.constant 0 : i32
    %c0_i32_0 = arith.constant 0 : i32
    %c0_i32_1 = arith.constant 0 : i32
    return %c0_i32, %c0_i32_0 : i32, i32
  }
  func.func @transform_7(%arg0: i32) -> (i32, i32) {
    %c0_i32 = arith.constant 0 : i32
    %c0_i32_0 = arith.constant 0 : i32
    return %arg0, %c0_i32 : i32, i32
  }
}

</mosaic_0001>

<llo_original>
// kernel: tpu_custom_call.1
$region0: #{tpu_custom_call.1}
  #allocation0 [shape = 'u32[]', space=smem, size = 0x4, offset = 0x4, fixed_abs, tag = 'smem constant byte address 0x4 - core index']
  #allocation1 [shape = 'u32[144,128]{1,0:T(1,128)}', space=vmem, size = 0x12000, scoped, tag = 'internal scratch']
  %s0 = inlined_call_operand.vmem [shape: f32[16,32], index: 0, kind: input, shape index: {}]
  %s1 = inlined_call_operand.vmem [shape: bf16[32,128], index: 1, kind: input, shape index: {}]
  %s2 = inlined_call_operand.vmem [shape: f32[1,128], index: 2, kind: input, shape index: {}]
  %s3 = inlined_call_operand.vmem [shape: bf16[128,64], index: 3, kind: input, shape index: {}]
  %s4 = inlined_call_operand.vmem [shape: f32[1,64], index: 4, kind: input, shape index: {}]
  %s5 = inlined_call_operand.vmem [shape: bf16[64,8], index: 5, kind: input, shape index: {}]
  %s6 = inlined_call_operand.vmem [shape: f32[1,8], index: 6, kind: input, shape index: {}]
  %s7 = inlined_call_operand.vmem [shape: f32[16,8], index: 7, kind: output, shape index: {}]
  %s8 = sld [smem:[#allocation0]]
  $region61: #{tpu_custom_call.1} parent=0
    _
  %s10 = ssub.s32 1, %s8
  %s11 = scalar_select 0, %s10, %s8
  loop: start=0, step=1, limit=4
  $region2: #{tpu_custom_call.1} parent=0 // loop_pre_header
    _
  $region3: #{tpu_custom_call.1} parent=0 // loop_header
    %s13 = sphi 0, %s17
    %p14 = scmp.ge.s32.totalorder %s13, 4
    %s23 = sphi 0, %s25
    %s26 = sphi 0, %s23
    %s27 = sphi 0, %s26
    %s43 = sphi 0, %s27
    %s47 = sphi 0, %s47
    %s49 = sphi 0, %s47
    %s50 = sphi 0, %s49
    %s64 = sphi 0, %s50
    %s68 = sphi 0, %s68
    %s70 = sphi 0, %s68
    %s71 = sphi 0, %s70
    %s85 = sphi 0, %s71
    %s89 = sphi 0, %s89
    %s91 = sphi 0, %s89
    %s92 = sphi 0, %s91
    %s106 = sphi 0, %s92
    %s110 = sphi 0, %s110
    %s112 = sphi 0, %s110
    %s113 = sphi 0, %s112
    %s127 = sphi 0, %s113
    %s131 = sphi 0, %s131
    %s133 = sphi 0, %s131
    %s134 = sphi 0, %s133
    %s148 = sphi 0, %s134
    %s152 = sphi 0, %s152
    %s154 = sphi 0, %s152
    %s155 = sphi 0, %s154
    %s169 = sphi 0, %s155
    %s175 = sphi 0, %s177
    %s178 = sphi 0, %s175
    %s179 = sphi 0, %s178
    %s195 = sphi 0, %s179
  $region4: #{tpu_custom_call.1} parent=0 // loop_header_branch
    %16 = sbr.rel (%p14) target = $region8
  $region5: #{tpu_custom_call.1} parent=0 // loop_body
    %s18 = ssub.s32 %s13, 1
    %s19 = ssub.s32 %s13, 2
    %s20 = sadd.s32 %s13, 1
    %s21 = ssub.s32 %s13, %s20
    %p22 = scmp.eq.s32.totalorder %s21, 0
    %s24 = sadd.s32 %s23, 1
    %s25 = scalar_select %p22, %s23, %s24
    %p28 = pneg %p22
    %p29 = scmp.eq.s32.totalorder %s13, 1
    %p30 = por %p28, %p29
    %p31 = scmp.ne.s32.totalorder %s23, %s26
    %p32 = scmp.eq.s32.totalorder %s13, 0
    %p33 = por %p31, %p32
    %p34 = scmp.ne.s32.totalorder %s23, %s26
    %p35 = scmp.eq.s32.totalorder %s18, 1
    %p36 = por %p34, %p35
    %p37 = scmp.ne.s32.totalorder %s26, %s27
    %p38 = scmp.eq.s32.totalorder %s18, 0
    %p39 = por %p37, %p38
    %p40 = scmp.ne.s32.totalorder %s26, %s27
    %p41 = scmp.eq.s32.totalorder %s19, 1
    %p42 = por %p40, %p41
    %p44 = scmp.ne.s32.totalorder %s27, %s43
    %p45 = scmp.eq.s32.totalorder %s19, 0
    %p46 = por %p44, %p45
    %s48 = sadd.s32 %s47, 1
    %p51 = scmp.eq.s32.totalorder %s13, 1
    %p52 = scmp.ne.s32.totalorder %s47, %s49
    %p53 = scmp.eq.s32.totalorder %s13, 0
    %p54 = por %p52, %p53
    %p55 = scmp.ne.s32.totalorder %s47, %s49
    %p56 = scmp.eq.s32.totalorder %s18, 1
    %p57 = por %p55, %p56
    %p58 = scmp.ne.s32.totalorder %s49, %s50
    %p59 = scmp.eq.s32.totalorder %s18, 0
    %p60 = por %p58, %p59
    %p61 = scmp.ne.s32.totalorder %s49, %s50
    %p62 = scmp.eq.s32.totalorder %s19, 1
    %p63 = por %p61, %p62
    %p65 = scmp.ne.s32.totalorder %s50, %s64
    %p66 = scmp.eq.s32.totalorder %s19, 0
    %p67 = por %p65, %p66
    %s69 = sadd.s32 %s68, 1
    %p72 = scmp.eq.s32.totalorder %s13, 1
    %p73 = scmp.ne.s32.totalorder %s68, %s70
    %p74 = scmp.eq.s32.totalorder %s13, 0
    %p75 = por %p73, %p74
    %p76 = scmp.ne.s32.totalorder %s68, %s70
    %p77 = scmp.eq.s32.totalorder %s18, 1
    %p78 = por %p76, %p77
    %p79 = scmp.ne.s32.totalorder %s70, %s71
    %p80 = scmp.eq.s32.totalorder %s18, 0
    %p81 = por %p79, %p80
    %p82 = scmp.ne.s32.totalorder %s70, %s71
    %p83 = scmp.eq.s32.totalorder %s19, 1
    %p84 = por %p82, %p83
    %p86 = scmp.ne.s32.totalorder %s71, %s85
    %p87 = scmp.eq.s32.totalorder %s19, 0
    %p88 = por %p86, %p87
    %s90 = sadd.s32 %s89, 1
    %p93 = scmp.eq.s32.totalorder %s13, 1
    %p94 = scmp.ne.s32.totalorder %s89, %s91
    %p95 = scmp.eq.s32.totalorder %s13, 0
    %p96 = por %p94, %p95
    %p97 = scmp.ne.s32.totalorder %s89, %s91
    %p98 = scmp.eq.s32.totalorder %s18, 1
    %p99 = por %p97, %p98
    %p100 = scmp.ne.s32.totalorder %s91, %s92
    %p101 = scmp.eq.s32.totalorder %s18, 0
    %p102 = por %p100, %p101
    %p103 = scmp.ne.s32.totalorder %s91, %s92
    %p104 = scmp.eq.s32.totalorder %s19, 1
    %p105 = por %p103, %p104
    %p107 = scmp.ne.s32.totalorder %s92, %s106
    %p108 = scmp.eq.s32.totalorder %s19, 0
    %p109 = por %p107, %p108
    %s111 = sadd.s32 %s110, 1
    %p114 = scmp.eq.s32.totalorder %s13, 1
    %p115 = scmp.ne.s32.totalorder %s110, %s112
    %p116 = scmp.eq.s32.totalorder %s13, 0
    %p117 = por %p115, %p116
    %p118 = scmp.ne.s32.totalorder %s110, %s112
    %p119 = scmp.eq.s32.totalorder %s18, 1
    %p120 = por %p118, %p119
    %p121 = scmp.ne.s32.totalorder %s112, %s113
    %p122 = scmp.eq.s32.totalorder %s18, 0
    %p123 = por %p121, %p122
    %p124 = scmp.ne.s32.totalorder %s112, %s113
    %p125 = scmp.eq.s32.totalorder %s19, 1
    %p126 = por %p124, %p125
    %p128 = scmp.ne.s32.totalorder %s113, %s127
    %p129 = scmp.eq.s32.totalorder %s19, 0
    %p130 = por %p128, %p129
    %s132 = sadd.s32 %s131, 1
    %p135 = scmp.eq.s32.totalorder %s13, 1
    %p136 = scmp.ne.s32.totalorder %s131, %s133
    %p137 = scmp.eq.s32.totalorder %s13, 0
    %p138 = por %p136, %p137
    %p139 = scmp.ne.s32.totalorder %s131, %s133
    %p140 = scmp.eq.s32.totalorder %s18, 1
    %p141 = por %p139, %p140
    %p142 = scmp.ne.s32.totalorder %s133, %s134
    %p143 = scmp.eq.s32.totalorder %s18, 0
    %p144 = por %p142, %p143
    %p145 = scmp.ne.s32.totalorder %s133, %s134
    %p146 = scmp.eq.s32.totalorder %s19, 1
    %p147 = por %p145, %p146
    %p149 = scmp.ne.s32.totalorder %s134, %s148
    %p150 = scmp.eq.s32.totalorder %s19, 0
    %p151 = por %p149, %p150
    %s153 = sadd.s32 %s152, 1
    %p156 = scmp.eq.s32.totalorder %s13, 1
    %p157 = scmp.ne.s32.totalorder %s152, %s154
    %p158 = scmp.eq.s32.totalorder %s13, 0
    %p159 = por %p157, %p158
    %p160 = scmp.ne.s32.totalorder %s152, %s154
    %p161 = scmp.eq.s32.totalorder %s18, 1
    %p162 = por %p160, %p161
    %p163 = scmp.ne.s32.totalorder %s154, %s155
    %p164 = scmp.eq.s32.totalorder %s18, 0
    %p165 = por %p163, %p164
    %p166 = scmp.ne.s32.totalorder %s154, %s155
    %p167 = scmp.eq.s32.totalorder %s19, 1
    %p168 = por %p166, %p167
    %p170 = scmp.ne.s32.totalorder %s155, %s169
    %p171 = scmp.eq.s32.totalorder %s19, 0
    %p172 = por %p170, %p171
    %s173 = ssub.s32 %s13, %s20
    %p174 = scmp.eq.s32.totalorder %s173, 0
    %s176 = sadd.s32 %s175, 1
    %s177 = scalar_select %p174, %s175, %s176
    %p180 = pneg %p174
    %p181 = scmp.eq.s32.totalorder %s13, 1
    %p182 = por %p180, %p181
    %p183 = scmp.ne.s32.totalorder %s175, %s178
    %p184 = scmp.eq.s32.totalorder %s13, 0
    %p185 = por %p183, %p184
    %p186 = scmp.ne.s32.totalorder %s175, %s178
    %p187 = scmp.eq.s32.totalorder %s18, 1
    %p188 = por %p186, %p187
    %p189 = scmp.ne.s32.totalorder %s178, %s179
    %p190 = scmp.eq.s32.totalorder %s18, 0
    %p191 = por %p189, %p190
    %p192 = scmp.ne.s32.totalorder %s178, %s179
    %p193 = scmp.eq.s32.totalorder %s19, 1
    %p194 = por %p192, %p193
    %p196 = scmp.ne.s32.totalorder %s179, %s195
    %p197 = scmp.eq.s32.totalorder %s19, 0
    %p198 = por %p196, %p197
    %p199 = scmp.le.s32.totalorder 1, %s13
    %p200 = scmp.lt.s32.totalorder %s13, 3
    %p201 = pnand %p199, %p200
    %p202 = pneg %p201
    // Predicated region
    $region9: #{tpu_custom_call.1} parent=5 // pred_check
      _
    $region10: #{tpu_custom_call.1} parent=5 // pred_check_branch
      %204 = sbr.rel (%p201) target = $region12
    $region11: #{tpu_custom_call.1} parent=5 // pred_region
      %s205 = ssub.s32 %s13, 1
      // Predicated region
      $region13: #{tpu_custom_call.1} parent=11 // pred_check
        %p206 = pneg %p60
      $region14: #{tpu_custom_call.1} parent=11 // pred_check_branch
        %208 = sbr.rel (%p206) target = $region16
      $region15: #{tpu_custom_call.1} parent=11 // pred_region
        _
      $region16: #{tpu_custom_call.1} parent=11 // pred_fallthru
        _
      // Predicated region
      $region17: #{tpu_custom_call.1} parent=11 // pred_check
        %p209 = pneg %p81
      $region18: #{tpu_custom_call.1} parent=11 // pred_check_branch
        %211 = sbr.rel (%p209) target = $region20
      $region19: #{tpu_custom_call.1} parent=11 // pred_region
        _
      $region20: #{tpu_custom_call.1} parent=11 // pred_fallthru
        _
      // Predicated region
      $region21: #{tpu_custom_call.1} parent=11 // pred_check
        %p212 = pneg %p102
      $region22: #{tpu_custom_call.1} parent=11 // pred_check_branch
        %214 = sbr.rel (%p212) target = $region24
      $region23: #{tpu_custom_call.1} parent=11 // pred_region
        _
      $region24: #{tpu_custom_call.1} parent=11 // pred_fallthru
        _
      // Predicated region
      $region25: #{tpu_custom_call.1} parent=11 // pred_check
        %p215 = pneg %p123
      $region26: #{tpu_custom_call.1} parent=11 // pred_check_branch
        %217 = sbr.rel (%p215) target = $region28
      $region27: #{tpu_custom_call.1} parent=11 // pred_region
        _
      $region28: #{tpu_custom_call.1} parent=11 // pred_fallthru
        _
      // Predicated region
      $region29: #{tpu_custom_call.1} parent=11 // pred_check
        %p218 = pneg %p144
      $region30: #{tpu_custom_call.1} parent=11 // pred_check_branch
        %220 = sbr.rel (%p218) target = $region32
      $region31: #{tpu_custom_call.1} parent=11 // pred_region
        _
      $region32: #{tpu_custom_call.1} parent=11 // pred_fallthru
        _
      // Predicated region
      $region33: #{tpu_custom_call.1} parent=11 // pred_check
        %p221 = pneg %p165
      $region34: #{tpu_custom_call.1} parent=11 // pred_check_branch
        %223 = sbr.rel (%p221) target = $region36
      $region35: #{tpu_custom_call.1} parent=11 // pred_region
        _
      $region36: #{tpu_custom_call.1} parent=11 // pred_fallthru
        _
    $region12: #{tpu_custom_call.1} parent=5 // pred_fallthru
      _
    %p224 = scmp.lt.s32.totalorder %s13, 2
    // Predicated region
    $region37: #{tpu_custom_call.1} parent=5 // pred_check
      %p225 = pneg %p224
    $region38: #{tpu_custom_call.1} parent=5 // pred_check_branch
      %227 = sbr.rel (%p225) target = $region40
    $region39: #{tpu_custom_call.1} parent=5 // pred_region
      // Predicated region
      $region41: #{tpu_custom_call.1} parent=39 // pred_check
        %p228 = pneg %p33
      $region42: #{tpu_custom_call.1} parent=39 // pred_check_branch
        %230 = sbr.rel (%p228) target = $region44
      $region43: #{tpu_custom_call.1} parent=39 // pred_region
        %p231 = scmp.lt.s32.totalorder %s13, 1
        %s232 = scalar_select %p231, %s13, 1
        %s233 = smul.addr %s232, 8
        %s234 = scalar_lea.vmem %s0, %s233
      $region44: #{tpu_custom_call.1} parent=39 // pred_fallthru
        _
    $region40: #{tpu_custom_call.1} parent=5 // pred_fallthru
      _
    %p235 = scmp.le.s32.totalorder 1, %s13
    %p236 = scmp.lt.s32.totalorder %s13, 3
    %p237 = pnand %p235, %p236
    %p238 = pneg %p237
    // Predicated region
    $region45: #{tpu_custom_call.1} parent=5 // pred_check
      _
    $region46: #{tpu_custom_call.1} parent=5 // pred_check_branch
      %240 = sbr.rel (%p237) target = $region48
    $region47: #{tpu_custom_call.1} parent=5 // pred_region
      %s241 = ssub.s32 %s13, 1
      %p242 = scmp.lt.s32.totalorder %s18, 1
      %s243 = scalar_select %p242, %s18, 1
      %s244 = smul.addr %s243, 8
      %s245 = scalar_lea.vmem %s0, %s244
      %p246 = pneg %p39
      %p247 = pneg %p36
      %p248 = pneg %p60
      %p249 = pneg %p57
      %p250 = pneg %p81
      %p251 = pneg %p78
      %p252 = pneg %p102
      %p253 = pneg %p99
      %p254 = pneg %p123
      %p255 = pneg %p120
      %p256 = pneg %p144
      %p257 = pneg %p141
      %p258 = pneg %p165
      %p259 = pneg %p162
      %p260 = pneg %p191
      %p261 = pneg %p188
      %p262 = scmp.lt.s32.totalorder %s18, 1
      %s263 = scalar_select %p262, %s18, 1
      %s264 = smul.addr %s263, 8
      %s265 = scalar_lea.vmem %s7, %s264
      %p266 = scmp.lt.s32.totalorder %s18, 1
      %s267 = scalar_select %p266, %s18, 1
      %s268 = smul.addr %s267, 8
      %s269 = scalar_lea.vmem %s0, %s268
      %p270 = scmp.lt.s32.totalorder %s18, 1
      %s271 = scalar_select %p270, %s18, 1
      %s272 = smul.addr %s271, 8
      %s273 = scalar_lea.vmem %s7, %s272
      %v275 = vld [vmem:[%s269] sm:$0xff]
      %v276 = vpack.c.bf16 %v275, %v275
      %v277 = vld [vmem:[%s1] sm:$0xf]
      %v278 = vld [vmem:[%s1 + $0x4] sm:$0xf]
      %v279 = vld [vmem:[%s1 + $0x8] sm:$0xf]
      %v280 = vld [vmem:[%s1 + $0xc] sm:$0xf]
      %v281 = vld [vmem:[%s2] sm:$0x1]
      %v283 = vlaneseq
      %v284 = vshrl.u32 %v283, 7
      %v285 = vsub.s32 0, %v284
      %v286 = vrot.slane %v281, %v285
      %v292 = vunpack.c.l.b16 %v277
      %v293 = vunpack.c.l.b16 %v278
      %v294 = vunpack.c.l.b16 %v279
      %v295 = vunpack.c.l.b16 %v280
      %v296 = vpack.c.b16 %v293, %v292
      %v297 = vpack.c.b16 %v295, %v294
      %vm300 = vcmask 261120
      %v302 = vsel %vm300, %v276, 0
      %304 = vmatprep.subr.bf16.mxu0 0
      %305 = vmatpush1.bf16.msra.mxu0 0
      %306 = vmatprep.subr.bf16.mxu0 0
      %307 = vmatpush1.bf16.msra.mxu0 0
      %308 = vmatprep.subr.bf16.mxu0 0
      %309 = vmatpush1.bf16.msra.mxu0 0
      %310 = vmatprep.subr.bf16.mxu0 0
      %311 = vmatpush1.bf16.msra.mxu0 0
      %312 = vmatprep.subr.bf16.mxu0 0
      %313 = vmatpush1.bf16.msra.mxu0 0
      %314 = vmatprep.subr.bf16.mxu0 0
      %315 = vmatpush1.bf16.msra.mxu0 0
      %316 = vmatprep.subr.bf16.mxu0 0
      %317 = vmatpush1.bf16.msra.mxu0 %v297
      %318 = vmatprep.subr.bf16.mxu0 0
      %319 = vmatpush1.bf16.msra.mxu0 %v296
      %320 = vmatprep.subr.bf16.mxu0 0
      %321 = vmatpush2.bf16.msra.mxu0 0
      %322 = vmatprep.subr.bf16.mxu0 0
      %323 = vmatpush2.bf16.msra.mxu0 0
      %324 = vmatprep.subr.bf16.mxu0 0
      %325 = vmatpush2.bf16.msra.mxu0 0
      %326 = vmatprep.subr.bf16.mxu0 0
      %327 = vmatpush2.bf16.msra.mxu0 0
      %328 = vmatprep.subr.bf16.mxu0 0
      %329 = vmatpush2.bf16.msra.mxu0 0
      %330 = vmatprep.subr.bf16.mxu0 0
      %331 = vmatpush2.bf16.msra.mxu0 0
      %332 = vmatprep.subr.bf16.mxu0 0
      %333 = vmatpush2.bf16.msra.mxu0 0
      %334 = vmatprep.subr.bf16.mxu0 0
      %335 = vmatpush2.bf16.msra.mxu0 0
      %336 = vmatprep.mubr.bf16.mxu0 0
      %337 = vmatmul.mubr.bf16.gmra.mxu0 %v302
      %v338 = vpop.f32.mrf.mxu0
      %v339 = vadd.f32 %v286, %v338
      %v340 = vpop.f32.mrf.mxu0
      %v341 = vpop.f32.mrf.mxu0
      %v342 = vpop.f32.mrf.mxu0
      %343 = vdwg.mxu0
      %v344 = vmax.f32 %v339, 0.0
      %v345 = vpack.c.bf16 %v344, %v344
      %v346 = vld [vmem:[%s3] sm:$0xf]
      %v347 = vld [vmem:[%s3 + $0x4] sm:$0xf]
      %v348 = vld [vmem:[%s3 + $0x8] sm:$0xf]
      %v349 = vld [vmem:[%s3 + $0xc] sm:$0xf]
      %v350 = vld [vmem:[%s3 + $0x10] sm:$0xf]
      %v351 = vld [vmem:[%s3 + $0x14] sm:$0xf]
      %v352 = vld [vmem:[%s3 + $0x18] sm:$0xf]
      %v353 = vld [vmem:[%s3 + $0x1c] sm:$0xf]
      %v354 = vld [vmem:[%s3 + $0x20] sm:$0xf]
      %v355 = vld [vmem:[%s3 + $0x24] sm:$0xf]
      %v356 = vld [vmem:[%s3 + $0x28] sm:$0xf]
      %v357 = vld [vmem:[%s3 + $0x2c] sm:$0xf]
      %v358 = vld [vmem:[%s3 + $0x30] sm:$0xf]
      %v359 = vld [vmem:[%s3 + $0x34] sm:$0xf]
      %v360 = vld [vmem:[%s3 + $0x38] sm:$0xf]
      %v361 = vld [vmem:[%s3 + $0x3c] sm:$0xf]
      %v362 = vld [vmem:[%s4] sm:$0x1]
      %v364 = vlaneseq
      %v365 = vshrl.u32 %v364, 7
      %v366 = vsub.s32 0, %v365
      %v367 = vrot.slane %v362, %v366
      %v385 = vunpack.c.l.b16 %v346
      %v386 = vunpack.c.l.b16 %v347
      %v387 = vunpack.c.l.b16 %v348
      %v388 = vunpack.c.l.b16 %v349
      %v389 = vunpack.c.l.b16 %v350
      %v390 = vunpack.c.l.b16 %v351
      %v391 = vunpack.c.l.b16 %v352
      %v392 = vunpack.c.l.b16 %v353
      %v393 = vunpack.c.l.b16 %v354
      %v394 = vunpack.c.l.b16 %v355
      %v395 = vunpack.c.l.b16 %v356
      %v396 = vunpack.c.l.b16 %v357
      %v397 = vunpack.c.l.b16 %v358
      %v398 = vunpack.c.l.b16 %v359
      %v399 = vunpack.c.l.b16 %v360
      %v400 = vunpack.c.l.b16 %v361
      %v401 = vpack.c.b16 %v386, %v385
      %v402 = vpack.c.b16 %v388, %v387
      %v403 = vpack.c.b16 %v390, %v389
      %v404 = vpack.c.b16 %v392, %v391
      %v405 = vpack.c.b16 %v394, %v393
      %v406 = vpack.c.b16 %v396, %v395
      %v407 = vpack.c.b16 %v398, %v397
      %v408 = vpack.c.b16 %v400, %v399
      %417 = vmatprep.subr.bf16.mxu0 0
      %418 = vmatpush1.bf16.msra.mxu0 %v408
      %419 = vmatprep.subr.bf16.mxu0 0
      %420 = vmatpush1.bf16.msra.mxu0 %v407
      %421 = vmatprep.subr.bf16.mxu0 0
      %422 = vmatpush1.bf16.msra.mxu0 %v406
      %423 = vmatprep.subr.bf16.mxu0 0
      %424 = vmatpush1.bf16.msra.mxu0 %v405
      %425 = vmatprep.subr.bf16.mxu0 0
      %426 = vmatpush1.bf16.msra.mxu0 %v404
      %427 = vmatprep.subr.bf16.mxu0 0
      %428 = vmatpush1.bf16.msra.mxu0 %v403
      %429 = vmatprep.subr.bf16.mxu0 0
      %430 = vmatpush1.bf16.msra.mxu0 %v402
      %431 = vmatprep.subr.bf16.mxu0 0
      %432 = vmatpush1.bf16.msra.mxu0 %v401
      %433 = vmatprep.subr.bf16.mxu0 0
      %434 = vmatpush2.bf16.msra.mxu0 0
      %435 = vmatprep.subr.bf16.mxu0 0
      %436 = vmatpush2.bf16.msra.mxu0 0
      %437 = vmatprep.subr.bf16.mxu0 0
      %438 = vmatpush2.bf16.msra.mxu0 0
      %439 = vmatprep.subr.bf16.mxu0 0
      %440 = vmatpush2.bf16.msra.mxu0 0
      %441 = vmatprep.subr.bf16.mxu0 0
      %442 = vmatpush2.bf16.msra.mxu0 0
      %443 = vmatprep.subr.bf16.mxu0 0
      %444 = vmatpush2.bf16.msra.mxu0 0
      %445 = vmatprep.subr.bf16.mxu0 0
      %446 = vmatpush2.bf16.msra.mxu0 0
      %447 = vmatprep.subr.bf16.mxu0 0
      %448 = vmatpush2.bf16.msra.mxu0 0
      %449 = vmatprep.mubr.bf16.mxu0 0
      %450 = vmatmul.mubr.bf16.gmra.mxu0 %v345
      %v451 = vpop.f32.mrf.mxu0
      %v452 = vadd.f32 %v367, %v451
      %v453 = vpop.f32.mrf.mxu0
      %v454 = vpop.f32.mrf.mxu0
      %v455 = vpop.f32.mrf.mxu0
      %456 = vdwg.mxu0
      %v457 = vmax.f32 %v452, 0.0
      %v458 = vpack.c.bf16 %v457, %v457
      %v459 = vld [vmem:[%s5] sm:$0xf]
      %v460 = vld [vmem:[%s5 + $0x4] sm:$0xf]
      %v461 = vld [vmem:[%s5 + $0x8] sm:$0xf]
      %v462 = vld [vmem:[%s5 + $0xc] sm:$0xf]
      %v463 = vld [vmem:[%s5 + $0x10] sm:$0xf]
      %v464 = vld [vmem:[%s5 + $0x14] sm:$0xf]
      %v465 = vld [vmem:[%s5 + $0x18] sm:$0xf]
      %v466 = vld [vmem:[%s5 + $0x1c] sm:$0xf]
      %v467 = vld [vmem:[%s6] sm:$0x1]
      %v469 = vlaneseq
      %v470 = vshrl.u32 %v469, 7
      %v471 = vsub.s32 0, %v470
      %v472 = vrot.slane %v467, %v471
      %v482 = vunpack.c.l.b16 %v459
      %v483 = vunpack.c.l.b16 %v460
      %v484 = vunpack.c.l.b16 %v461
      %v485 = vunpack.c.l.b16 %v462
      %v486 = vunpack.c.l.b16 %v463
      %v487 = vunpack.c.l.b16 %v464
      %v488 = vunpack.c.l.b16 %v465
      %v489 = vunpack.c.l.b16 %v466
      %v490 = vpack.c.b16 %v483, %v482
      %v491 = vpack.c.b16 %v485, %v484
      %v492 = vpack.c.b16 %v487, %v486
      %v493 = vpack.c.b16 %v489, %v488
      %vm498 = vcmask 523264
      %v500 = vsel %vm498, %v458, 0
      %502 = vmatprep.subr.bf16.mxu0 0
      %503 = vmatpush1.bf16.msra.mxu0 0
      %504 = vmatprep.subr.bf16.mxu0 0
      %505 = vmatpush1.bf16.msra.mxu0 0
      %506 = vmatprep.subr.bf16.mxu0 0
      %507 = vmatpush1.bf16.msra.mxu0 0
      %508 = vmatprep.subr.bf16.mxu0 0
      %509 = vmatpush1.bf16.msra.mxu0 0
      %510 = vmatprep.subr.bf16.mxu0 0
      %511 = vmatpush1.bf16.msra.mxu0 %v493
      %512 = vmatprep.subr.bf16.mxu0 0
      %513 = vmatpush1.bf16.msra.mxu0 %v492
      %514 = vmatprep.subr.bf16.mxu0 0
      %515 = vmatpush1.bf16.msra.mxu0 %v491
      %516 = vmatprep.subr.bf16.mxu0 0
      %517 = vmatpush1.bf16.msra.mxu0 %v490
      %518 = vmatprep.subr.bf16.mxu0 0
      %519 = vmatpush2.bf16.msra.mxu0 0
      %520 = vmatprep.subr.bf16.mxu0 0
      %521 = vmatpush2.bf16.msra.mxu0 0
      %522 = vmatprep.subr.bf16.mxu0 0
      %523 = vmatpush2.bf16.msra.mxu0 0
      %524 = vmatprep.subr.bf16.mxu0 0
      %525 = vmatpush2.bf16.msra.mxu0 0
      %526 = vmatprep.subr.bf16.mxu0 0
      %527 = vmatpush2.bf16.msra.mxu0 0
      %528 = vmatprep.subr.bf16.mxu0 0
      %529 = vmatpush2.bf16.msra.mxu0 0
      %530 = vmatprep.subr.bf16.mxu0 0
      %531 = vmatpush2.bf16.msra.mxu0 0
      %532 = vmatprep.subr.bf16.mxu0 0
      %533 = vmatpush2.bf16.msra.mxu0 0
      %534 = vmatprep.mubr.bf16.mxu0 0
      %535 = vmatmul.mubr.bf16.gmra.mxu0 %v500
      %v536 = vpop.f32.mrf.mxu0
      %v537 = vadd.f32 %v472, %v536
      %v538 = vpop.f32.mrf.mxu0
      %v539 = vpop.f32.mrf.mxu0
      %v540 = vpop.f32.mrf.mxu0
      %541 = vdwg.mxu0
      %vm542 = vcmask 64512
      %v543 = vsel %vm542, %v537, -inf
      %544 = vmax.xlane.f32.xlu0 %v543
      %v545 = vpop.xlane.xlu0 %544
      %v546 = vsub.f32 %v537, %v545
      %v547 = vmul.f32 %v546, 1.442695
      %v548 = vpow.pop %v547
      %v549 = vsel %vm542, %v548, 0.0
      %550 = vadd.xlane.f32.xlu0 %v549
      %v551 = vpop.xlane.xlu0 %550
      %v552 = vrcp.pop %v551
      %v553 = vmul.f32 %v548, %v552
      %554 = vst.msk [vmem:[%s273] sm:$0xff] %vm542, %v553
      %p555 = scmp.lt.s32.totalorder %s18, 1
      %s556 = scalar_select %p555, %s18, 1
      %s557 = smul.addr %s556, 8
      %s558 = scalar_lea.vmem %s7, %s557
      // Predicated region
      $region49: #{tpu_custom_call.1} parent=47 // pred_check
        %p559 = pneg %p188
      $region50: #{tpu_custom_call.1} parent=47 // pred_check_branch
        %561 = sbr.rel (%p559) target = $region52
      $region51: #{tpu_custom_call.1} parent=47 // pred_region
        _
      $region52: #{tpu_custom_call.1} parent=47 // pred_fallthru
        _
    $region48: #{tpu_custom_call.1} parent=5 // pred_fallthru
      _
    %p562 = scmp.le.s32.totalorder 2, %s13
    // Predicated region
    $region53: #{tpu_custom_call.1} parent=5 // pred_check
      %p563 = pneg %p562
    $region54: #{tpu_custom_call.1} parent=5 // pred_check_branch
      %565 = sbr.rel (%p563) target = $region56
    $region55: #{tpu_custom_call.1} parent=5 // pred_region
      %s566 = ssub.s32 %s13, 2
      // Predicated region
      $region57: #{tpu_custom_call.1} parent=55 // pred_check
        %p567 = pneg %p194
      $region58: #{tpu_custom_call.1} parent=55 // pred_check_branch
        %569 = sbr.rel (%p567) target = $region60
      $region59: #{tpu_custom_call.1} parent=55 // pred_region
        %p570 = scmp.lt.s32.totalorder %s19, 1
        %s571 = scalar_select %p570, %s19, 1
        %s572 = smul.addr %s571, 8
        %s573 = scalar_lea.vmem %s7, %s572
      $region60: #{tpu_custom_call.1} parent=55 // pred_fallthru
        _
    $region56: #{tpu_custom_call.1} parent=5 // pred_fallthru
      _
  $region6: #{tpu_custom_call.1} parent=0 // loop_footer
    %s17 = sadd.s32 1, %s13
  $region7: #{tpu_custom_call.1} parent=0 // loop_footer_branch
    %12 = sbr.rel target = $region3
  $region8: #{tpu_custom_call.1} parent=0 // loop_exit
    _

</llo_original>
